<compile_context>
chip_gen: v5e
topology: v5e:2x2
jax: 0.10.0
libtpu: 0.0.40
codegen_flags: <defaults>
</compile_context>

<pallas_src>
import math

import jax
import jax.numpy as jnp
from jax import lax
from jax.experimental import pallas as pl
from jax.experimental.pallas import tpu as pltpu

_LANE = 128
_TARGET_BLOCK_BYTES = 4 * 1024 * 1024   # per-input VMEM block; ~85-90% of HBM roofline


def _choose_tile(rows, cols, itemsize, block_bytes):
    """Largest multiple-of-128 spatial tile keeping one input block <= block_bytes."""
    max_tile = max(_LANE, (block_bytes // (rows * itemsize)) // _LANE * _LANE)
    cols_padded = pl.cdiv(cols, _LANE) * _LANE
    return min(max_tile, cols_padded)


def _make_tversky_kernel(rows, cols, tile, n_inner, beta, eps, needs_mask):
    n_chunks = tile // _LANE
    unroll = 4 if n_chunks % 4 == 0 else (2 if n_chunks % 2 == 0 else 1)
    beta = float(beta)
    eps = float(eps)

    def kernel(p_ref, t_ref, out_ref, acc_ref):
        o = pl.program_id(0)           # "parallel" outer split of the spatial axis
        i = pl.program_id(1)           # "arbitrary" (reduction) spatial axis

        @pl.when(i == 0)
        def _init():
            acc_ref[...] = jnp.zeros_like(acc_ref)

        blk_col0 = (o * n_inner + i) * tile   # global column of this block's lane 0

        def chunk(m, acc):
            start = pl.multiple_of(m * _LANE, _LANE)
            p = p_ref[:, pl.ds(start, _LANE)].astype(jnp.float32)
            t = t_ref[:, pl.ds(start, _LANE)].astype(jnp.float32)
            # Exact simplification of the Tversky terms (see header comment).
            nr = t * p
            dr = beta * p + (1.0 - beta) * t
            ratio = (1.0 + nr) / (1.0 + dr + eps)
            if needs_mask:
                col = (lax.broadcasted_iota(jnp.int32, (rows, _LANE), 1)
                       + blk_col0 + start)
                ratio = jnp.where(col < cols, ratio, 0.0)
            return acc + ratio         # lane-resident VPU adds; no per-step XLU reduce

        acc_ref[...] = lax.fori_loop(0, n_chunks, chunk, acc_ref[...],
                                     unroll=unroll)

        @pl.when(i == n_inner - 1)
        def _finalize():
            # Single cross-sublane reduce; the 128-lane sum finishes in the wrapper.
            out_ref[0] = jnp.sum(acc_ref[...], axis=0, keepdims=True)

    return kernel


def tversky_loss(pred, target, beta=0.9, eps=1e-9, reduction="mean",
                 block_bytes=_TARGET_BLOCK_BYTES):
    """Pallas TPU implementation of TverskyLoss.forward (mean reduction only)."""
    if reduction != "mean":
        raise ValueError(f"Reduction {reduction} is not allowed")
    if pred.shape != target.shape:
        raise ValueError("input and target must have the same shape")

    n = math.prod(pred.shape)
    # Lane-dense 2-D factorization (contiguous reshape -> no HBM copy); rows <= 8
    # keeps sublanes as full as the element count allows.
    rows = 8
    while n % rows:
        rows //= 2
    cols = n // rows
    p2 = pred.reshape(rows, cols)
    t2 = target.reshape(rows, cols)

    itemsize = max(p2.dtype.itemsize, t2.dtype.itemsize)
    tile = _choose_tile(rows, cols, itemsize, block_bytes)
    n_blocks = pl.cdiv(cols, tile)
    # Split blocks into (parallel outer, arbitrary inner) so v7x's two TensorCores
    # each take half; harmless (sequential) on single-TC v5e/v6e.
    n_outer = 2 if (n_blocks >= 2 and n_blocks % 2 == 0) else 1
    n_inner = n_blocks // n_outer
    needs_mask = (cols % tile) != 0

    kernel = _make_tversky_kernel(rows, cols, tile, n_inner, beta, eps, needs_mask)

    lane_sums = pl.pallas_call(
        kernel,
        out_shape=jax.ShapeDtypeStruct((n_outer, 1, _LANE), jnp.float32),
        grid_spec=pltpu.PrefetchScalarGridSpec(
            num_scalar_prefetch=0,
            grid=(n_outer, n_inner),
            in_specs=[
                pl.BlockSpec((rows, tile), lambda o, i: (0, o * n_inner + i)),
                pl.BlockSpec((rows, tile), lambda o, i: (0, o * n_inner + i)),
            ],
            out_specs=pl.BlockSpec((1, 1, _LANE), lambda o, i: (o, 0, 0)),
            scratch_shapes=[pltpu.VMEM((rows, _LANE), jnp.float32)],
        ),
        compiler_params=pltpu.CompilerParams(
            dimension_semantics=("parallel", "arbitrary"),
            vmem_limit_bytes=48 * 1024 * 1024,   # safe on v5e/v6e (128 MiB) and v7x (64 MiB)
        ),
    )(p2, t2)

    # loss = mean(1 - ratio) = 1 - sum(ratio) / n   (tiny finishing reduction in JAX).
    return 1.0 - jnp.sum(lane_sums) / n


def _tversky_ref(p, t, beta=0.9, eps=1e-9):
    nr = t * p
    dr = nr + beta * (1.0 - t) * p + (1.0 - beta) * t * (1.0 - p)
    cost = 1.0 - (1.0 + nr) / (1.0 + dr + eps)
    return jnp.mean(cost)


if __name__ == "__main__":
    key = jax.random.PRNGKey(0)
    k1, k2 = jax.random.split(key)
    B, C, H, W = 2, 4, 16, 16

    # input: per-class probability maps; target: one-hot segmentation maps.
    logits = jax.random.normal(k1, (B, C, H, W), jnp.float32)
    pred = jax.nn.softmax(logits, axis=1)
    labels = jax.random.randint(k2, (B, H, W), 0, C)
    target = jax.nn.one_hot(labels, C, axis=1, dtype=jnp.float32)   # (B, C, H, W)

    loss = tversky_loss(pred, target, beta=0.9)
    jax.block_until_ready(loss)
    ref = _tversky_ref(pred, target, beta=0.9)
    assert jnp.allclose(loss, ref, rtol=1e-5, atol=1e-6), (loss, ref)

    # Ragged shape exercises the in-kernel tail mask (no HBM pad copy).
    k3, k4 = jax.random.split(k1)
    pred2 = jax.nn.sigmoid(jax.random.normal(k3, (2, 3, 7, 5), jnp.float32))
    targ2 = (jax.random.uniform(k4, (2, 3, 7, 5)) > 0.5).astype(jnp.float32)
    loss2 = tversky_loss(pred2, targ2, beta=0.9)
    jax.block_until_ready(loss2)
    ref2 = _tversky_ref(pred2, targ2, beta=0.9)
    assert jnp.allclose(loss2, ref2, rtol=1e-5, atol=1e-6), (loss2, ref2)

    # Small block_bytes forces multiple blocks -> exercises the megacore split
    # (parallel outer axis), the inner reduction axis, and the ragged tail mask.
    k5, k6 = jax.random.split(k3)
    pred3 = jax.nn.sigmoid(jax.random.normal(k5, (8, 5, 7, 13), jnp.float32))
    targ3 = (jax.random.uniform(k6, (8, 5, 7, 13)) > 0.5).astype(jnp.float32)
    loss3 = tversky_loss(pred3, targ3, beta=0.9, block_bytes=4096)
    jax.block_until_ready(loss3)
    ref3 = _tversky_ref(pred3, targ3, beta=0.9)
    assert jnp.allclose(loss3, ref3, rtol=1e-5, atol=1e-6), (loss3, ref3)

    print("KERNEL_OK")
</pallas_src>

<mosaic_0001>
module attributes {stable_mosaic.version = 11 : i64} {
  func.func @kernel(%arg0: i32, %arg1: i32, %arg2: memref<8x256xf32, #tpu.memory_space<vmem>>, %arg3: memref<8x256xf32, #tpu.memory_space<vmem>>, %arg4: memref<1x1x128xf32, #tpu.memory_space<vmem>>, %arg5: memref<8x128xf32, #tpu.memory_space<vmem>>) attributes {dimension_semantics = [#tpu.dimension_semantics<parallel>, #tpu.dimension_semantics<arbitrary>], iteration_bounds = array<i64: 1, 1>, scalar_prefetch = 0 : i64, scratch_operands = 1 : i64, tpu.core_type = #tpu.core_type<tc>, window_params = [{transform_indices = @transform_0, window_bounds = array<i64: 8, 256>}, {transform_indices = @transform_1, window_bounds = array<i64: 8, 256>}, {transform_indices = @transform_2, window_bounds = array<i64: 1, 1, 128>}]} {
    %c0_i32 = arith.constant 0 : i32
    %0 = arith.cmpi eq, %arg1, %c0_i32 : i32
    %1 = arith.extui %0 : i1 to i32
    %c0_i32_0 = arith.constant 0 : i32
    %2 = arith.cmpi ne, %1, %c0_i32_0 : i32
    scf.if %2 {
      %cst_21 = arith.constant 0.000000e+00 : f32
      %48 = vector.broadcast %cst_21 : f32 to vector<8x128xf32>
      %c0_22 = arith.constant 0 : index
      %c0_23 = arith.constant 0 : index
      %49 = vector.load %arg5[%c0_22, %c0_23] : memref<8x128xf32, #tpu.memory_space<vmem>>, vector<8x128xf32>
      tpu.vector_store %arg5[%c0_22, %c0_23], %48 {strides = array<i32>} : memref<8x128xf32, #tpu.memory_space<vmem>>, vector<8x128xf32>,
    } else {
    }
    %c0 = arith.constant 0 : index
    %c0_1 = arith.constant 0 : index
    %3 = vector.load %arg5[%c0, %c0_1] : memref<8x128xf32, #tpu.memory_space<vmem>>, vector<8x128xf32>
    %c0_i32_2 = arith.constant 0 : i32
    %c128_i32 = arith.constant 128 : i32
    %4 = arith.muli %c0_i32_2, %c128_i32 : i32
    %5 = tpu.assume_multiple %4, 128 : i32
    %c0_3 = arith.constant 0 : index
    %6 = arith.index_cast %5 : i32 to index
    %7 = vector.load %arg2[%c0_3, %6] : memref<8x256xf32, #tpu.memory_space<vmem>>, vector<8x128xf32>
    %c0_4 = arith.constant 0 : index
    %8 = arith.index_cast %5 : i32 to index
    %9 = vector.load %arg3[%c0_4, %8] : memref<8x256xf32, #tpu.memory_space<vmem>>, vector<8x128xf32>
    %10 = arith.mulf %9, %7 : vector<8x128xf32>
    %cst = arith.constant 0.899999976 : f32
    %11 = vector.broadcast %cst : f32 to vector<8x128xf32>
    %12 = arith.mulf %11, %7 : vector<8x128xf32>
    %cst_5 = arith.constant 1.000000e-01 : f32
    %13 = vector.broadcast %cst_5 : f32 to vector<8x128xf32>
    %14 = arith.mulf %13, %9 : vector<8x128xf32>
    %15 = arith.addf %12, %14 : vector<8x128xf32>
    %cst_6 = arith.constant 1.000000e+00 : f32
    %16 = vector.broadcast %cst_6 : f32 to vector<8x128xf32>
    %17 = arith.addf %16, %10 : vector<8x128xf32>
    %cst_7 = arith.constant 1.000000e+00 : f32
    %18 = vector.broadcast %cst_7 : f32 to vector<8x128xf32>
    %19 = arith.addf %18, %15 : vector<8x128xf32>
    %cst_8 = arith.constant 9.99999971E-10 : f32
    %20 = vector.broadcast %cst_8 : f32 to vector<8x128xf32>
    %21 = arith.addf %19, %20 : vector<8x128xf32>
    %22 = arith.divf %17, %21 : vector<8x128xf32>
    %23 = arith.addf %3, %22 : vector<8x128xf32>
    %c1_i32 = arith.constant 1 : i32
    %c128_i32_9 = arith.constant 128 : i32
    %24 = arith.muli %c1_i32, %c128_i32_9 : i32
    %25 = tpu.assume_multiple %24, 128 : i32
    %c0_10 = arith.constant 0 : index
    %26 = arith.index_cast %25 : i32 to index
    %27 = vector.load %arg2[%c0_10, %26] : memref<8x256xf32, #tpu.memory_space<vmem>>, vector<8x128xf32>
    %c0_11 = arith.constant 0 : index
    %28 = arith.index_cast %25 : i32 to index
    %29 = vector.load %arg3[%c0_11, %28] : memref<8x256xf32, #tpu.memory_space<vmem>>, vector<8x128xf32>
    %30 = arith.mulf %29, %27 : vector<8x128xf32>
    %cst_12 = arith.constant 0.899999976 : f32
    %31 = vector.broadcast %cst_12 : f32 to vector<8x128xf32>
    %32 = arith.mulf %31, %27 : vector<8x128xf32>
    %cst_13 = arith.constant 1.000000e-01 : f32
    %33 = vector.broadcast %cst_13 : f32 to vector<8x128xf32>
    %34 = arith.mulf %33, %29 : vector<8x128xf32>
    %35 = arith.addf %32, %34 : vector<8x128xf32>
    %cst_14 = arith.constant 1.000000e+00 : f32
    %36 = vector.broadcast %cst_14 : f32 to vector<8x128xf32>
    %37 = arith.addf %36, %30 : vector<8x128xf32>
    %cst_15 = arith.constant 1.000000e+00 : f32
    %38 = vector.broadcast %cst_15 : f32 to vector<8x128xf32>
    %39 = arith.addf %38, %35 : vector<8x128xf32>
    %cst_16 = arith.constant 9.99999971E-10 : f32
    %40 = vector.broadcast %cst_16 : f32 to vector<8x128xf32>
    %41 = arith.addf %39, %40 : vector<8x128xf32>
    %42 = arith.divf %37, %41 : vector<8x128xf32>
    %43 = arith.addf %23, %42 : vector<8x128xf32>
    %c2_i32 = arith.constant 2 : i32
    %c0_17 = arith.constant 0 : index
    %c0_18 = arith.constant 0 : index
    %44 = vector.load %arg5[%c0_17, %c0_18] : memref<8x128xf32, #tpu.memory_space<vmem>>, vector<8x128xf32>
    tpu.vector_store %arg5[%c0_17, %c0_18], %43 {strides = array<i32>} : memref<8x128xf32, #tpu.memory_space<vmem>>, vector<8x128xf32>,
    %c0_i32_19 = arith.constant 0 : i32
    %45 = arith.cmpi eq, %arg1, %c0_i32_19 : i32
    %46 = arith.extui %45 : i1 to i32
    %c0_i32_20 = arith.constant 0 : i32
    %47 = arith.cmpi ne, %46, %c0_i32_20 : i32
    scf.if %47 {
      %c0_21 = arith.constant 0 : index
      %c0_22 = arith.constant 0 : index
      %48 = vector.load %arg5[%c0_21, %c0_22] : memref<8x128xf32, #tpu.memory_space<vmem>>, vector<8x128xf32>
      %cst_23 = arith.constant dense<0.000000e+00> : vector<128xf32>
      %49 = vector.multi_reduction <add>, %48, %cst_23 [0] : vector<8x128xf32> to vector<128xf32>
      %50 = vector.shape_cast %49 : vector<128xf32> to vector<1x128xf32>
      %c0_24 = arith.constant 0 : index
      %c0_25 = arith.constant 0 : index
      %c0_26 = arith.constant 0 : index
      %51 = vector.load %arg4[%c0_24, %c0_25, %c0_26] : memref<1x1x128xf32, #tpu.memory_space<vmem>>, vector<1x1x128xf32>
      %52 = vector.shape_cast %51 : vector<1x1x128xf32> to vector<1x128xf32>
      %53 = vector.shape_cast %50 : vector<1x128xf32> to vector<1x1x128xf32>
      tpu.vector_store %arg4[%c0_24, %c0_25, %c0_26], %53 {strides = array<i32>} : memref<1x1x128xf32, #tpu.memory_space<vmem>>, vector<1x1x128xf32>,
    } else {
    }
    return
  }
  func.func @transform_0(%arg0: i32, %arg1: i32) -> (i32, i32) {
    %c1_i32 = arith.constant 1 : i32
    %0 = arith.muli %arg0, %c1_i32 : i32
    %1 = arith.addi %0, %arg1 : i32
    %c0_i32 = arith.constant 0 : i32
    %c0_i32_0 = arith.constant 0 : i32
    return %c0_i32, %1 : i32, i32
  }
  func.func @transform_1(%arg0: i32, %arg1: i32) -> (i32, i32) {
    %c1_i32 = arith.constant 1 : i32
    %0 = arith.muli %arg0, %c1_i32 : i32
    %1 = arith.addi %0, %arg1 : i32
    %c0_i32 = arith.constant 0 : i32
    %c0_i32_0 = arith.constant 0 : i32
    return %c0_i32, %1 : i32, i32
  }
  func.func @transform_2(%arg0: i32, %arg1: i32) -> (i32, i32, i32) {
    %c0_i32 = arith.constant 0 : i32
    %c0_i32_0 = arith.constant 0 : i32
    %c0_i32_1 = arith.constant 0 : i32
    return %arg0, %c0_i32, %c0_i32_0 : i32, i32, i32
  }
}

</mosaic_0001>

<llo_original>
// kernel: tpu_custom_call.1
$region0: #{tpu_custom_call.1}
  #allocation0 [shape = 'u32[]', space=smem, size = 0x4, offset = 0x4, fixed_abs, tag = 'smem constant byte address 0x4 - core index']
  #allocation1 [shape = 'u32[72,128]{1,0:T(1,128)}', space=vmem, size = 0x9000, scoped, tag = 'internal scratch']
  #allocation2 [shape = 'f32[8,128]{1,0:T(8,128)}', space=vmem, size = 0x1000, scoped, tag = 'scratch operand']
  %s0 = inlined_call_operand.hbm [shape: f32[8,256], index: 0, kind: input, shape index: {}]
  %s1 = inlined_call_operand.hbm [shape: f32[8,256], index: 1, kind: input, shape index: {}]
  %s2 = inlined_call_operand.hbm [shape: f32[1,1,128], index: 2, kind: output, shape index: {}]
  %s3 = sld [smem:[#allocation0]]
  $region34: #{tpu_custom_call.1} parent=0
    _
  %s5 = ssub.s32 1, %s3
  %s6 = scalar_select 0, %s5, %s3
  $region1: #{tpu_custom_call.1} parent=0
    #allocation3 [shape = 'u8[8192]{0}', space=vmem, size = 0x2000, scoped, tag = 'input window, operand 0, single buffered']
    #allocation4 [shape = 's32[1]{0}', space=sflag, size = 0x4, scoped, tag = 'scoped memory for tpu_custom_call.1']
    #allocation5 [shape = 's32[1]{0}', space=sflag, size = 0x4, scoped, tag = 'scoped memory for tpu_custom_call.1']
    #allocation6 [shape = 'u8[8192]{0}', space=vmem, size = 0x2000, scoped, tag = 'input window, operand 1, single buffered']
    #allocation7 [shape = 's32[1]{0}', space=sflag, size = 0x4, scoped, tag = 'scoped memory for tpu_custom_call.1']
    #allocation8 [shape = 'u8[512]{0}', space=vmem, size = 0x400, scoped, tag = 'output window, operand 0, single buffered']
    %7 = vsyncpa [#allocation4], 0
    %8 = vsyncpa [#allocation7], 0
    %9 = vsyncpa [#allocation5], 0
    // Predicated region
    $region2: #{tpu_custom_call.1} parent=1 // pred_check
      _
    $region3: #{tpu_custom_call.1} parent=1 // pred_check_branch
      %11 = sbr.rel (0) target = $region5
    $region4: #{tpu_custom_call.1} parent=1 // pred_region
      %s12 = sadd.s32 0, 0
      %s13 = smul.u32 2, %s12
      %15 = vsyncadd [#allocation4], 0
      %s16 = smul.addr %s13, 8
      %s17 = scalar_lea.hbm %s0, %s16
      %s19 = sshll.u32 %s17, 4
      %s20 = int_to_ptr.hbm [resolvable:$true] %s19
      %s21 = sshll.u32 [#allocation3], 4
      %s22 = int_to_ptr.vmem [resolvable:$true] %s21
      %24 = dma.hbm_to_vmem [thread:$0]  %s20, 256, %s22, [#allocation4]
    $region5: #{tpu_custom_call.1} parent=1 // pred_fallthru
      _
    // Predicated region
    $region6: #{tpu_custom_call.1} parent=1 // pred_check
      _
    $region7: #{tpu_custom_call.1} parent=1 // pred_check_branch
      %26 = sbr.rel (0) target = $region9
    $region8: #{tpu_custom_call.1} parent=1 // pred_region
      %s27 = sadd.s32 0, 0
      %s28 = smul.u32 2, %s27
      %30 = vsyncadd [#allocation7], 0
      %s31 = smul.addr %s28, 8
      %s32 = scalar_lea.hbm %s1, %s31
      %s34 = sshll.u32 %s32, 4
      %s35 = int_to_ptr.hbm [resolvable:$true] %s34
      %s36 = sshll.u32 [#allocation6], 4
      %s37 = int_to_ptr.vmem [resolvable:$true] %s36
      %39 = dma.hbm_to_vmem [thread:$0]  %s35, 256, %s37, [#allocation7]
    $region9: #{tpu_custom_call.1} parent=1 // pred_fallthru
      _
    // Predicated region
    $region10: #{tpu_custom_call.1} parent=1 // pred_check
      _
    $region11: #{tpu_custom_call.1} parent=1 // pred_check_branch
      %41 = sbr.rel (0) target = $region13
    $region12: #{tpu_custom_call.1} parent=1 // pred_region
      %43 = dma.done [#allocation4], 256
    $region13: #{tpu_custom_call.1} parent=1 // pred_fallthru
      _
    // Predicated region
    $region14: #{tpu_custom_call.1} parent=1 // pred_check
      _
    $region15: #{tpu_custom_call.1} parent=1 // pred_check_branch
      %45 = sbr.rel (0) target = $region17
    $region16: #{tpu_custom_call.1} parent=1 // pred_region
      %47 = dma.done [#allocation7], 256
    $region17: #{tpu_custom_call.1} parent=1 // pred_fallthru
      _
    %s48 = sadd.s32 0, 0
    %s49 = smul.u32 2, %s48
    %s50 = sadd.s32 0, 0
    %s51 = smul.u32 2, %s50
    %p52 = scmp.eq.s32.totalorder 0, 0
    // Predicated region
    $region18: #{tpu_custom_call.1} parent=1 // pred_check
      %p53 = pneg %p52
    $region19: #{tpu_custom_call.1} parent=1 // pred_check_branch
      %55 = sbr.rel (%p53) target = $region21
    $region20: #{tpu_custom_call.1} parent=1 // pred_region
      %56 = vst [vmem:[#allocation2] sm:$0xff] 0.0
    $region21: #{tpu_custom_call.1} parent=1 // pred_fallthru
      _
    %v57 = vld [vmem:[#allocation2] sm:$0xff]
    %v58 = vld [vmem:[#allocation3] sm:$0xff]
    %v59 = vld [vmem:[#allocation6] sm:$0xff]
    %v60 = vmul.f32 %v59, %v58
    %v61 = vmul.f32 %v58, 0.9
    %v62 = vmul.f32 %v59, 0.1
    %v63 = vadd.f32 %v61, %v62
    %v64 = vadd.f32 %v60, 1.0
    %v65 = vadd.f32 %v63, 1.0
    %v66 = vadd.f32 %v65, 1e-09
    %v67 = vrcp.pop %v66
    %v68 = vmul.f32 %v66, %v67
    %v69 = vsub.f32 1.0, %v68
    %v70 = vmul.f32 %v67, %v69
    %v71 = vadd.f32 %v67, %v70
    %vm72 = vweird.f32 %v66
    %vm73 = vweird.f32 %v67
    %vm74 = vmor %vm72, %vm73
    %v75 = vsel %vm74, %v67, %v71
    %v76 = vand.u32 2147483647, %v66
    %vm77 = vcmp.eq.f32.partialorder %v76, 8.507059e+37
    %v78 = vand.u32 %v66, 2147483648
    %v79 = vor.u32 1.1754944e-38, %v78
    %v80 = vsel %vm77, %v79, %v75
    %v81 = vmul.f32 %v64, %v80
    %v82 = vadd.f32 %v57, %v81
    %s83 = scalar_lea.vmem [#allocation3], 8
    %v84 = vld [vmem:[%s83] sm:$0xff]
    %s85 = scalar_lea.vmem [#allocation6], 8
    %v86 = vld [vmem:[%s85] sm:$0xff]
    %v87 = vmul.f32 %v86, %v84
    %v88 = vmul.f32 %v84, 0.9
    %v89 = vmul.f32 %v86, 0.1
    %v90 = vadd.f32 %v88, %v89
    %v91 = vadd.f32 %v87, 1.0
    %v92 = vadd.f32 %v90, 1.0
    %v93 = vadd.f32 %v92, 1e-09
    %v94 = vrcp.pop %v93
    %v95 = vmul.f32 %v93, %v94
    %v96 = vsub.f32 1.0, %v95
    %v97 = vmul.f32 %v94, %v96
    %v98 = vadd.f32 %v94, %v97
    %vm99 = vweird.f32 %v93
    %vm100 = vweird.f32 %v94
    %vm101 = vmor %vm99, %vm100
    %v102 = vsel %vm101, %v94, %v98
    %v103 = vand.u32 2147483647, %v93
    %vm104 = vcmp.eq.f32.partialorder %v103, 8.507059e+37
    %v105 = vand.u32 %v93, 2147483648
    %v106 = vor.u32 1.1754944e-38, %v105
    %v107 = vsel %vm104, %v106, %v102
    %v108 = vmul.f32 %v91, %v107
    %v109 = vadd.f32 %v82, %v108
    %110 = vst [vmem:[#allocation2] sm:$0xff] %v109
    // Predicated region
    $region22: #{tpu_custom_call.1} parent=1 // pred_check
      %p111 = pneg %p52
    $region23: #{tpu_custom_call.1} parent=1 // pred_check_branch
      %113 = sbr.rel (%p111) target = $region25
    $region24: #{tpu_custom_call.1} parent=1 // pred_region
      %v114 = vld [vmem:[#allocation2] sm:$0xff]
      %v115 = vrot.slane %v114, 4
      %v116 = vadd.f32 %v114, %v115
      %v117 = vrot.slane %v116, 2
      %v118 = vadd.f32 %v116, %v117
      %v119 = vrot.slane %v118, 1
      %v120 = vadd.f32 %v118, %v119
      %121 = vst [vmem:[#allocation8] sm:$0x1] %v120
    $region25: #{tpu_custom_call.1} parent=1 // pred_fallthru
      _
    // Predicated region
    $region26: #{tpu_custom_call.1} parent=1 // pred_check
      _
    $region27: #{tpu_custom_call.1} parent=1 // pred_check_branch
      %123 = sbr.rel (0) target = $region29
    $region28: #{tpu_custom_call.1} parent=1 // pred_region
      %125 = vsyncadd [#allocation5], 0
      %s127 = sshll.u32 [#allocation8], 4
      %s128 = int_to_ptr.vmem [resolvable:$true] %s127
      %s129 = sshll.u32 %s2, 4
      %s130 = int_to_ptr.hbm [resolvable:$true] %s129
      %132 = dma.vmem_to_hbm [thread:$0]  %s128, 16, %s130, [#allocation5]
    $region29: #{tpu_custom_call.1} parent=1 // pred_fallthru
      _
    // Predicated region
    $region30: #{tpu_custom_call.1} parent=1 // pred_check
      _
    $region31: #{tpu_custom_call.1} parent=1 // pred_check_branch
      %134 = sbr.rel (0) target = $region33
    $region32: #{tpu_custom_call.1} parent=1 // pred_region
      %136 = dma.done [#allocation5], 16
    $region33: #{tpu_custom_call.1} parent=1 // pred_fallthru
      _
    %137 = vsyncpa [#allocation4], 1
    %138 = vsyncpa [#allocation7], 1
    %139 = vsyncpa [#allocation5], 1

</llo_original>
